<compile_context>
chip_gen: v7x
topology: tpu7x:2x2x1
jax: 0.10.0
libtpu: 0.0.40
codegen_flags: <defaults>
</compile_context>

<pallas_src>
import jax
import jax.numpy as jnp
from jax.experimental import pallas as pl
from jax.experimental.pallas import tpu as pltpu

EPS = 1e-5


def _stacked_kernel(x_ref, wt_ref, bgb_ref, o_ref, acc_ref):
    i = pl.program_id(1)              # layer index (arbitrary / sequential)
    n_layers = pl.num_programs(1)

    # Layer 0: seed the resident f32 activation from the pipelined x block
    # (cast happens in-kernel; x arrives in its native dtype).
    @pl.when(i == 0)
    def _():
        acc_ref[...] = x_ref[...].astype(jnp.float32)

    x = acc_ref[...]                  # (TM, H) f32 — running activation
    w = wt_ref[0]                     # (H, H)  pre-transposed weight (in, out)
    bgb = bgb_ref[0]                  # (3, H)  packed [bias; gamma; beta]
    b = bgb[0:1, :]
    g = bgb[1:2, :]
    beta = bgb[2:3, :]

    # Linear: MXU matmul in the weight dtype (f32 or bf16), f32 accumulation.
    y = jnp.dot(x.astype(w.dtype), w, preferred_element_type=jnp.float32) + b

    # LayerNorm over the hidden dim — two-pass statistics, all f32.
    mean = jnp.mean(y, axis=-1, keepdims=True)
    yc = y - mean
    var = jnp.mean(yc * yc, axis=-1, keepdims=True)
    out = yc * jax.lax.rsqrt(var + EPS) * g + beta

    # Running activation stays resident in VMEM scratch across layers.
    acc_ref[...] = out

    # Single HBM writeback per token tile, in the output (=input) dtype.
    @pl.when(i == n_layers - 1)
    def _():
        o_ref[...] = out.astype(o_ref.dtype)


def replicated_forward(x, w_t, b, gamma, beta, *, tm=None):
    """Forward pass of Replicated(Linear->LayerNorm, L layers).

    x:      [B, S, H]   any float dtype (f32 / bf16); output matches x.dtype
    w_t:    [L, H, H]   pre-transposed Linear weights (in, out); f32 or bf16
    b:      [L, H]      Linear bias
    gamma:  [L, H]      LayerNorm weight
    beta:   [L, H]      LayerNorm bias
    """
    B, S, H = x.shape
    L = w_t.shape[0]
    BS = B * S

    if tm is None:
        # Two token tiles by default (v7x megacore) when sublane-aligned;
        # at real sizes pick tm from the weight-streaming roofline instead.
        if BS % 2 == 0 and (BS // 2) % 8 == 0:
            tm = BS // 2
        else:
            tm = BS
    assert BS % tm == 0, "token tile must divide B*S"
    assert tm == BS or tm % 8 == 0, "token tile must be sublane aligned"
    # NOTE: real deployments want H % 128 == 0 (ideally 256 on v6e/v7x) and a
    # roofline-sized tm; the demo H=32 relies on the full-dim exception.

    x2 = x.reshape(BS, H)             # no dtype cast here (done in-kernel)
    bgb = jnp.stack(
        [b.astype(jnp.float32), gamma.astype(jnp.float32), beta.astype(jnp.float32)],
        axis=1,
    )                                  # (L, 3, H) — one per-layer DMA stream

    # Explicit scoped-VMEM budget: double-buffered weights + x + output,
    # packed vectors, and the f32 activation scratch, with headroom.
    wb = w_t.dtype.itemsize
    xb = x.dtype.itemsize
    need = (
        2 * H * H * wb        # weight double buffer
        + 2 * 3 * H * 4       # packed bias/gamma/beta double buffer
        + 2 * tm * H * xb     # x double buffer
        + 2 * tm * H * xb     # output double buffer
        + tm * H * 4          # f32 running-activation scratch
    )
    vmem_limit = min(2 * need + (4 << 20), 64 << 20)

    out = pl.pallas_call(
        _stacked_kernel,
        out_shape=jax.ShapeDtypeStruct((BS, H), x.dtype),
        grid_spec=pltpu.PrefetchScalarGridSpec(
            num_scalar_prefetch=0,
            grid=(BS // tm, L),
            in_specs=[
                # x: pipelined, index constant over the layer axis -> DMA'd
                # only when the token tile changes, prefetched ahead.
                pl.BlockSpec((tm, H), lambda t, i: (t, 0)),
                # Per-layer weight, streamed (auto double-buffered) along the
                # layer axis.
                pl.BlockSpec((1, H, H), lambda t, i: (i, 0, 0)),
                # Packed [bias; gamma; beta] per layer.
                pl.BlockSpec((1, 3, H), lambda t, i: (i, 0, 0)),
            ],
            # Constant index across the layer axis; written once per tile.
            out_specs=pl.BlockSpec((tm, H), lambda t, i: (t, 0)),
            # f32 running activation, persistent across grid iterations.
            scratch_shapes=[pltpu.VMEM((tm, H), jnp.float32)],
        ),
        compiler_params=pltpu.CompilerParams(
            dimension_semantics=("parallel", "arbitrary"),
            vmem_limit_bytes=int(vmem_limit),
        ),
    )(x2, w_t, bgb)
    return out.reshape(B, S, H)


def _reference(x, w_t, b, gamma, beta):
    """Pure-JAX reference with the same dtype policy (dot in w_t.dtype,
    f32 accumulation, f32 LayerNorm, output in x.dtype)."""
    y = x.astype(jnp.float32)
    L = w_t.shape[0]
    for i in range(L):
        y = jnp.dot(y.astype(w_t.dtype), w_t[i],
                    preferred_element_type=jnp.float32) + b[i]
        mean = jnp.mean(y, axis=-1, keepdims=True)
        var = jnp.mean((y - mean) ** 2, axis=-1, keepdims=True)
        y = (y - mean) * jax.lax.rsqrt(var + EPS) * gamma[i] + beta[i]
    return y.astype(x.dtype)


if __name__ == "__main__":
    B, S, H = 2, 8, 32
    L = 3       # n_layers
    TM = 8      # token tile (exercises the parallel token axis: 2 tiles)

    key = jax.random.PRNGKey(0)
    kx, kw, kb = jax.random.split(key, 3)

    x = jax.random.normal(kx, (B, S, H), dtype=jnp.float32)

    # Deterministic init mirroring nn.Linear.reset_parameters():
    #   kaiming_uniform(a=sqrt(5)) -> U(-1/sqrt(fan_in), 1/sqrt(fan_in)); same bound for bias.
    bound = 1.0 / (H ** 0.5)
    w = jax.random.uniform(kw, (L, H, H), minval=-bound, maxval=bound,
                           dtype=jnp.float32)       # PyTorch layout (out, in)
    w_t = jnp.transpose(w, (0, 2, 1))               # pre-transpose -> (in, out)
    b = jax.random.uniform(kb, (L, H), minval=-bound, maxval=bound,
                           dtype=jnp.float32)
    # nn.LayerNorm.reset_parameters(): weight=1, bias=0.
    gamma = jnp.ones((L, H), dtype=jnp.float32)
    beta = jnp.zeros((L, H), dtype=jnp.float32)

    # --- f32 activations + f32 weights: matches the PyTorch module numerics. ---
    out_f32 = replicated_forward(x, w_t, b, gamma, beta, tm=TM)
    jax.block_until_ready(out_f32)
    ref_f32 = _reference(x, w_t, b, gamma, beta)
    assert out_f32.dtype == x.dtype
    assert jnp.allclose(out_f32, ref_f32, atol=1e-4, rtol=1e-4), \
        "f32 mismatch vs reference"

    # --- f32 activations + bf16 weights: halves weight DMA / VMEM, doubles
    #     MXU throughput; f32 accumulation + f32 LayerNorm kept. ---
    w_t_bf16 = w_t.astype(jnp.bfloat16)
    out_bf16w = replicated_forward(x, w_t_bf16, b, gamma, beta, tm=TM)
    jax.block_until_ready(out_bf16w)
    ref_bf16w = _reference(x, w_t_bf16, b, gamma, beta)
    assert jnp.allclose(out_bf16w, ref_bf16w, atol=1e-2, rtol=1e-2), \
        "bf16-weight mismatch vs reference"

    # --- bf16 activations + bf16 weights (deployment config): native-dtype
    #     input DMA and bf16 writeback, no wrapper-side cast passes. ---
    x_bf16 = x.astype(jnp.bfloat16)
    out_bf16 = replicated_forward(x_bf16, w_t_bf16, b, gamma, beta, tm=TM)
    jax.block_until_ready(out_bf16)
    ref_bf16 = _reference(x_bf16, w_t_bf16, b, gamma, beta)
    assert out_bf16.dtype == jnp.bfloat16
    assert jnp.allclose(out_bf16.astype(jnp.float32),
                        ref_bf16.astype(jnp.float32),
                        atol=5e-2, rtol=5e-2), \
        "bf16-activation mismatch vs reference"

    print("KERNEL_OK")
</pallas_src>

<mosaic_0001>
module attributes {stable_mosaic.version = 11 : i64} {
  func.func @_stacked_kernel(%arg0: i32, %arg1: i32, %arg2: memref<8x32xf32, #tpu.memory_space<vmem>>, %arg3: memref<1x32x32xf32, #tpu.memory_space<vmem>>, %arg4: memref<1x3x32xf32, #tpu.memory_space<vmem>>, %arg5: memref<8x32xf32, #tpu.memory_space<vmem>>, %arg6: memref<8x32xf32, #tpu.memory_space<vmem>>) attributes {dimension_semantics = [#tpu.dimension_semantics<parallel>, #tpu.dimension_semantics<arbitrary>], iteration_bounds = array<i64: 2, 3>, scalar_prefetch = 0 : i64, scratch_operands = 1 : i64, tpu.core_type = #tpu.core_type<tc>, window_params = [{transform_indices = @transform_0, window_bounds = array<i64: 8, 32>}, {transform_indices = @transform_1, window_bounds = array<i64: 1, 32, 32>}, {transform_indices = @transform_2, window_bounds = array<i64: 1, 3, 32>}, {transform_indices = @transform_3, window_bounds = array<i64: 8, 32>}]} {
    %c0_i32 = arith.constant 0 : i32
    %0 = arith.cmpi eq, %arg1, %c0_i32 : i32
    %1 = arith.extui %0 : i1 to i32
    %c0_i32_0 = arith.constant 0 : i32
    %2 = arith.cmpi ne, %1, %c0_i32_0 : i32
    scf.if %2 {
      %c0_16 = arith.constant 0 : index
      %c0_17 = arith.constant 0 : index
      %38 = vector.load %arg2[%c0_16, %c0_17] : memref<8x32xf32, #tpu.memory_space<vmem>>, vector<8x32xf32>
      %c0_18 = arith.constant 0 : index
      %c0_19 = arith.constant 0 : index
      %39 = vector.load %arg6[%c0_18, %c0_19] : memref<8x32xf32, #tpu.memory_space<vmem>>, vector<8x32xf32>
      tpu.vector_store %arg6[%c0_18, %c0_19], %38 {strides = array<i32>} : memref<8x32xf32, #tpu.memory_space<vmem>>, vector<8x32xf32>,
    } else {
    }
    %c0 = arith.constant 0 : index
    %c0_1 = arith.constant 0 : index
    %3 = vector.load %arg6[%c0, %c0_1] : memref<8x32xf32, #tpu.memory_space<vmem>>, vector<8x32xf32>
    %c0_2 = arith.constant 0 : index
    %c0_3 = arith.constant 0 : index
    %c0_4 = arith.constant 0 : index
    %4 = vector.load %arg3[%c0_2, %c0_3, %c0_4] : memref<1x32x32xf32, #tpu.memory_space<vmem>>, vector<1x32x32xf32>
    %5 = vector.shape_cast %4 : vector<1x32x32xf32> to vector<32x32xf32>
    %c0_5 = arith.constant 0 : index
    %c0_6 = arith.constant 0 : index
    %c0_7 = arith.constant 0 : index
    %6 = vector.load %arg4[%c0_5, %c0_6, %c0_7] : memref<1x3x32xf32, #tpu.memory_space<vmem>>, vector<1x3x32xf32>
    %7 = vector.shape_cast %6 : vector<1x3x32xf32> to vector<3x32xf32>
    %8 = vector.extract_strided_slice %7 {offsets = [0, 0], sizes = [1, 32], strides = [1, 1]} : vector<3x32xf32> to vector<1x32xf32>
    %9 = vector.extract_strided_slice %7 {offsets = [1, 0], sizes = [1, 32], strides = [1, 1]} : vector<3x32xf32> to vector<1x32xf32>
    %10 = vector.extract_strided_slice %7 {offsets = [2, 0], sizes = [1, 32], strides = [1, 1]} : vector<3x32xf32> to vector<1x32xf32>
    %cst = arith.constant dense<0.000000e+00> : vector<8x32xf32>
    %11 = tpu.matmul %3, %5, %cst {dimension_numbers = #tpu.dot_dimension_numbers<[1], [0], [0], [1], [0, 0, 1, 1], [], []>} : vector<8x32xf32>, vector<32x32xf32>, vector<8x32xf32> -> vector<8x32xf32>
    %12 = vector.broadcast %8 : vector<1x32xf32> to vector<8x32xf32>
    %13 = arith.addf %11, %12 : vector<8x32xf32>
    %cst_8 = arith.constant dense<0.000000e+00> : vector<8xf32>
    %14 = vector.multi_reduction <add>, %13, %cst_8 [1] : vector<8x32xf32> to vector<8xf32>
    %15 = vector.shape_cast %14 : vector<8xf32> to vector<8x1xf32>
    %cst_9 = arith.constant 3.200000e+01 : f32
    %16 = vector.broadcast %cst_9 : f32 to vector<8x1xf32>
    %17 = arith.divf %15, %16 : vector<8x1xf32>
    %18 = vector.broadcast %17 : vector<8x1xf32> to vector<8x32xf32>
    %19 = arith.subf %13, %18 : vector<8x32xf32>
    %20 = arith.mulf %19, %19 : vector<8x32xf32>
    %cst_10 = arith.constant dense<0.000000e+00> : vector<8xf32>
    %21 = vector.multi_reduction <add>, %20, %cst_10 [1] : vector<8x32xf32> to vector<8xf32>
    %22 = vector.shape_cast %21 : vector<8xf32> to vector<8x1xf32>
    %cst_11 = arith.constant 3.200000e+01 : f32
    %23 = vector.broadcast %cst_11 : f32 to vector<8x1xf32>
    %24 = arith.divf %22, %23 : vector<8x1xf32>
    %cst_12 = arith.constant 9.99999974E-6 : f32
    %25 = vector.broadcast %cst_12 : f32 to vector<8x1xf32>
    %26 = arith.addf %24, %25 : vector<8x1xf32>
    %27 = math.rsqrt %26 : vector<8x1xf32>
    %28 = vector.broadcast %27 : vector<8x1xf32> to vector<8x32xf32>
    %29 = arith.mulf %19, %28 : vector<8x32xf32>
    %30 = vector.broadcast %9 : vector<1x32xf32> to vector<8x32xf32>
    %31 = arith.mulf %29, %30 : vector<8x32xf32>
    %32 = vector.broadcast %10 : vector<1x32xf32> to vector<8x32xf32>
    %33 = arith.addf %31, %32 : vector<8x32xf32>
    %c0_13 = arith.constant 0 : index
    %c0_14 = arith.constant 0 : index
    %34 = vector.load %arg6[%c0_13, %c0_14] : memref<8x32xf32, #tpu.memory_space<vmem>>, vector<8x32xf32>
    tpu.vector_store %arg6[%c0_13, %c0_14], %33 {strides = array<i32>} : memref<8x32xf32, #tpu.memory_space<vmem>>, vector<8x32xf32>,
    %c2_i32 = arith.constant 2 : i32
    %35 = arith.cmpi eq, %arg1, %c2_i32 : i32
    %36 = arith.extui %35 : i1 to i32
    %c0_i32_15 = arith.constant 0 : i32
    %37 = arith.cmpi ne, %36, %c0_i32_15 : i32
    scf.if %37 {
      %c0_16 = arith.constant 0 : index
      %c0_17 = arith.constant 0 : index
      %38 = vector.load %arg5[%c0_16, %c0_17] : memref<8x32xf32, #tpu.memory_space<vmem>>, vector<8x32xf32>
      tpu.vector_store %arg5[%c0_16, %c0_17], %33 {strides = array<i32>} : memref<8x32xf32, #tpu.memory_space<vmem>>, vector<8x32xf32>,
    } else {
    }
    return
  }
  func.func @transform_0(%arg0: i32, %arg1: i32) -> (i32, i32) {
    %c0_i32 = arith.constant 0 : i32
    %c0_i32_0 = arith.constant 0 : i32
    return %arg0, %c0_i32 : i32, i32
  }
  func.func @transform_1(%arg0: i32, %arg1: i32) -> (i32, i32, i32) {
    %c0_i32 = arith.constant 0 : i32
    %c0_i32_0 = arith.constant 0 : i32
    %c0_i32_1 = arith.constant 0 : i32
    return %arg1, %c0_i32, %c0_i32_0 : i32, i32, i32
  }
  func.func @transform_2(%arg0: i32, %arg1: i32) -> (i32, i32, i32) {
    %c0_i32 = arith.constant 0 : i32
    %c0_i32_0 = arith.constant 0 : i32
    %c0_i32_1 = arith.constant 0 : i32
    return %arg1, %c0_i32, %c0_i32_0 : i32, i32, i32
  }
  func.func @transform_3(%arg0: i32, %arg1: i32) -> (i32, i32) {
    %c0_i32 = arith.constant 0 : i32
    %c0_i32_0 = arith.constant 0 : i32
    return %arg0, %c0_i32 : i32, i32
  }
}

</mosaic_0001>

<llo_original>
// kernel: tpu_custom_call.1
$region0: #{tpu_custom_call.1}
  #allocation0 [shape = 'u32[]', space=smem, size = 0x4, offset = 0x4, fixed_abs, tag = 'smem constant byte address 0x4 - core index']
  #allocation1 [shape = 'u32[144,128]{1,0:T(1,128)}', space=vmem, size = 0x12000, scoped, tag = 'internal scratch']
  #allocation2 [shape = 'f32[8,32]{1,0:T(8,128)}', space=vmem, size = 0x1000, scoped, tag = 'scratch operand']
  %s0 = inlined_call_operand.hbm [shape: f32[16,32], index: 0, kind: input, shape index: {}]
  %s1 = inlined_call_operand.hbm [shape: f32[3,32,32], index: 1, kind: input, shape index: {}]
  %s2 = inlined_call_operand.hbm [shape: f32[3,3,32], index: 2, kind: input, shape index: {}]
  %s3 = inlined_call_operand.hbm [shape: f32[16,32], index: 3, kind: output, shape index: {}]
  %s4 = sld [smem:[#allocation0]]
  $region65: #{tpu_custom_call.1} parent=0
    _
  %s6 = ssub.s32 1, %s4
  %s7 = scalar_select 0, %s6, %s4
  $region1: #{tpu_custom_call.1} parent=0
    #allocation3 [shape = 'u8[8192]{0}', space=vmem, size = 0x2000, scoped, tag = 'input window, operand 0']
    #allocation4 [shape = 's32[2]{0}', space=sflag, size = 0x8, scoped, tag = 'scoped memory for tpu_custom_call.1']
    #allocation5 [shape = 's32[2]{0}', space=sflag, size = 0x8, scoped, tag = 'scoped memory for tpu_custom_call.1']
    #allocation6 [shape = 'u8[32768]{0}', space=vmem, size = 0x8000, scoped, tag = 'input window, operand 1']
    #allocation7 [shape = 's32[2]{0}', space=sflag, size = 0x8, scoped, tag = 'scoped memory for tpu_custom_call.1']
    #allocation8 [shape = 'u8[4096]{0}', space=vmem, size = 0x1000, scoped, tag = 'input window, operand 2']
    #allocation9 [shape = 'u8[8192]{0}', space=vmem, size = 0x2000, scoped, tag = 'output window, operand 0']
    %8 = vsyncpa [#allocation4], 0
    %s9 = scalar_lea.sflag [#allocation4], 1
    %10 = vsyncpa %s9, 0
    %11 = vsyncpa [#allocation7], 0
    %s12 = scalar_lea.sflag [#allocation7], 1
    %13 = vsyncpa %s12, 0
    %14 = vsyncpa [#allocation5], 0
    %s15 = scalar_lea.sflag [#allocation5], 1
    %16 = vsyncpa %s15, 0
    loop: start=0, step=1, limit=8
    $region2: #{tpu_custom_call.1} parent=1 // loop_pre_header
      _
    $region3: #{tpu_custom_call.1} parent=1 // loop_header
      %s18 = sphi 0, %s22
      %p19 = scmp.ge.s32.totalorder %s18, 8
      %s25 = sphi 0, %s37
      %s26 = sphi 0, %s33
      %s27 = sphi 0, %s25
      %s28 = sphi 0, %s26
      %s29 = sphi 0, %s27
      %s30 = sphi 0, %s28
      %s40 = sphi 0, %s42
      %s43 = sphi 0, %s40
      %s44 = sphi 0, %s43
      %s60 = sphi 0, %s44
      %s66 = sphi 0, %s68
      %s69 = sphi 0, %s66
      %s70 = sphi 0, %s69
      %s86 = sphi 0, %s70
      %s92 = sphi 0, %s94
      %s95 = sphi 0, %s92
      %s96 = sphi 0, %s95
      %s112 = sphi 0, %s96
      %s118 = sphi 0, %s120
      %s121 = sphi 0, %s118
      %s122 = sphi 0, %s121
      %s138 = sphi 0, %s122
    $region4: #{tpu_custom_call.1} parent=1 // loop_header_branch
      %21 = sbr.rel (%p19) target = $region8
    $region5: #{tpu_custom_call.1} parent=1 // loop_body
      %s23 = ssub.s32 %s18, 1
      %s24 = ssub.s32 %s18, 2
      %s31 = sadd.s32 1, %s26
      %p32 = scmp.ge.s32.totalorder %s31, 3
      %s33 = scalar_select %p32, 0, %s31
      %s34 = sadd.s32 1, %s25
      %s35 = scalar_select %p32, %s34, %s25
      %p36 = scmp.ge.s32.totalorder %s35, 2
      %s37 = scalar_select %p36, 0, %s35
      %s38 = ssub.s32 %s25, %s37
      %p39 = scmp.eq.s32.totalorder %s38, 0
      %s41 = sadd.s32 %s40, 1
      %s42 = scalar_select %p39, %s40, %s41
      %p45 = pneg %p39
      %p46 = scmp.eq.s32.totalorder %s18, 5
      %p47 = por %p45, %p46
      %p48 = scmp.ne.s32.totalorder %s40, %s43
      %p49 = scmp.eq.s32.totalorder %s18, 0
      %p50 = por %p48, %p49
      %p51 = scmp.ne.s32.totalorder %s40, %s43
      %p52 = scmp.eq.s32.totalorder %s23, 5
      %p53 = por %p51, %p52
      %p54 = scmp.ne.s32.totalorder %s43, %s44
      %p55 = scmp.eq.s32.totalorder %s23, 0
      %p56 = por %p54, %p55
      %p57 = scmp.ne.s32.totalorder %s43, %s44
      %p58 = scmp.eq.s32.totalorder %s24, 5
      %p59 = por %p57, %p58
      %p61 = scmp.ne.s32.totalorder %s44, %s60
      %p62 = scmp.eq.s32.totalorder %s24, 0
      %p63 = por %p61, %p62
      %s64 = ssub.s32 %s26, %s33
      %p65 = scmp.eq.s32.totalorder %s64, 0
      %s67 = sadd.s32 %s66, 1
      %s68 = scalar_select %p65, %s66, %s67
      %p71 = pneg %p65
      %p72 = scmp.eq.s32.totalorder %s18, 5
      %p73 = por %p71, %p72
      %p74 = scmp.ne.s32.totalorder %s66, %s69
      %p75 = scmp.eq.s32.totalorder %s18, 0
      %p76 = por %p74, %p75
      %p77 = scmp.ne.s32.totalorder %s66, %s69
      %p78 = scmp.eq.s32.totalorder %s23, 5
      %p79 = por %p77, %p78
      %p80 = scmp.ne.s32.totalorder %s69, %s70
      %p81 = scmp.eq.s32.totalorder %s23, 0
      %p82 = por %p80, %p81
      %p83 = scmp.ne.s32.totalorder %s69, %s70
      %p84 = scmp.eq.s32.totalorder %s24, 5
      %p85 = por %p83, %p84
      %p87 = scmp.ne.s32.totalorder %s70, %s86
      %p88 = scmp.eq.s32.totalorder %s24, 0
      %p89 = por %p87, %p88
      %s90 = ssub.s32 %s26, %s33
      %p91 = scmp.eq.s32.totalorder %s90, 0
      %s93 = sadd.s32 %s92, 1
      %s94 = scalar_select %p91, %s92, %s93
      %p97 = pneg %p91
      %p98 = scmp.eq.s32.totalorder %s18, 5
      %p99 = por %p97, %p98
      %p100 = scmp.ne.s32.totalorder %s92, %s95
      %p101 = scmp.eq.s32.totalorder %s18, 0
      %p102 = por %p100, %p101
      %p103 = scmp.ne.s32.totalorder %s92, %s95
      %p104 = scmp.eq.s32.totalorder %s23, 5
      %p105 = por %p103, %p104
      %p106 = scmp.ne.s32.totalorder %s95, %s96
      %p107 = scmp.eq.s32.totalorder %s23, 0
      %p108 = por %p106, %p107
      %p109 = scmp.ne.s32.totalorder %s95, %s96
      %p110 = scmp.eq.s32.totalorder %s24, 5
      %p111 = por %p109, %p110
      %p113 = scmp.ne.s32.totalorder %s96, %s112
      %p114 = scmp.eq.s32.totalorder %s24, 0
      %p115 = por %p113, %p114
      %s116 = ssub.s32 %s25, %s37
      %p117 = scmp.eq.s32.totalorder %s116, 0
      %s119 = sadd.s32 %s118, 1
      %s120 = scalar_select %p117, %s118, %s119
      %p123 = pneg %p117
      %p124 = scmp.eq.s32.totalorder %s18, 5
      %p125 = por %p123, %p124
      %p126 = scmp.ne.s32.totalorder %s118, %s121
      %p127 = scmp.eq.s32.totalorder %s18, 0
      %p128 = por %p126, %p127
      %p129 = scmp.ne.s32.totalorder %s118, %s121
      %p130 = scmp.eq.s32.totalorder %s23, 5
      %p131 = por %p129, %p130
      %p132 = scmp.ne.s32.totalorder %s121, %s122
      %p133 = scmp.eq.s32.totalorder %s23, 0
      %p134 = por %p132, %p133
      %p135 = scmp.ne.s32.totalorder %s121, %s122
      %p136 = scmp.eq.s32.totalorder %s24, 5
      %p137 = por %p135, %p136
      %p139 = scmp.ne.s32.totalorder %s122, %s138
      %p140 = scmp.eq.s32.totalorder %s24, 0
      %p141 = por %p139, %p140
      %p142 = scmp.le.s32.totalorder 1, %s18
      %p143 = scmp.lt.s32.totalorder %s18, 7
      %p144 = pnand %p142, %p143
      %p145 = pneg %p144
      // Predicated region
      $region9: #{tpu_custom_call.1} parent=5 // pred_check
        _
      $region10: #{tpu_custom_call.1} parent=5 // pred_check_branch
        %147 = sbr.rel (%p144) target = $region12
      $region11: #{tpu_custom_call.1} parent=5 // pred_region
        %s148 = ssub.s32 %s18, 1
      $region12: #{tpu_custom_call.1} parent=5 // pred_fallthru
        _
      %p149 = scmp.lt.s32.totalorder %s18, 6
      // Predicated region
      $region13: #{tpu_custom_call.1} parent=5 // pred_check
        %p150 = pneg %p149
      $region14: #{tpu_custom_call.1} parent=5 // pred_check_branch
        %152 = sbr.rel (%p150) target = $region16
      $region15: #{tpu_custom_call.1} parent=5 // pred_region
        // Predicated region
        $region17: #{tpu_custom_call.1} parent=15 // pred_check
          %p153 = pneg %p50
        $region18: #{tpu_custom_call.1} parent=15 // pred_check_branch
          %155 = sbr.rel (%p153) target = $region20
        $region19: #{tpu_custom_call.1} parent=15 // pred_region
          %s156 = sand.u32 %s40, 1
          %s157 = scalar_lea.sflag [#allocation4], %s156
          %s158 = sand.u32 %s40, 1
          %s159 = smul.addr %s158, 8
          %s160 = scalar_lea.vmem [#allocation3], %s159
          %s162 = ssub.s32 128, 128
          %163 = vsyncadd %s157, %s162
          %s164 = smul.addr %s25, 128
          %s165 = scalar_lea.hbm %s0, %s164
          %s167 = sshll.u32 %s160, 4
          %s168 = int_to_ptr.vmem [resolvable:$true] %s167
          %170 = dma.hbm_to_vmem [thread:$0]  %s165, 128, %s168, %s157
        $region20: #{tpu_custom_call.1} parent=15 // pred_fallthru
          _
        // Predicated region
        $region21: #{tpu_custom_call.1} parent=15 // pred_check
          %p171 = pneg %p76
        $region22: #{tpu_custom_call.1} parent=15 // pred_check_branch
          %173 = sbr.rel (%p171) target = $region24
        $region23: #{tpu_custom_call.1} parent=15 // pred_region
          %s174 = sand.u32 %s18, 1
          %s175 = scalar_lea.sflag [#allocation7], %s174
          %s176 = sand.u32 %s66, 1
          %s177 = smul.addr %s176, 32
          %s178 = scalar_lea.vmem [#allocation6], %s177
          %s180 = ssub.s32 512, 512
          %181 = vsyncadd %s175, %s180
          %s182 = smul.addr %s26, 4
          %s183 = smul.addr %s182, 128
          %s184 = scalar_lea.hbm %s1, %s183
          %s185 = sshll.u32 %s178, 4
          %s186 = int_to_ptr.vmem [resolvable:$true] %s185
          %191 = dma.hbm_to_vmem [thread:$0]  %s184, 512, %s186, %s175, 128, 128, 8
        $region24: #{tpu_custom_call.1} parent=15 // pred_fallthru
          _
        // Predicated region
        $region25: #{tpu_custom_call.1} parent=15 // pred_check
          %p192 = pneg %p102
        $region26: #{tpu_custom_call.1} parent=15 // pred_check_branch
          %194 = sbr.rel (%p192) target = $region28
        $region27: #{tpu_custom_call.1} parent=15 // pred_region
          %s195 = sand.u32 %s18, 1
          %s196 = scalar_lea.sflag [#allocation7], %s195
          %s197 = sand.u32 %s92, 1
          %s198 = smul.addr %s197, 4
          %s199 = scalar_lea.vmem [#allocation8], %s198
          %s201 = ssub.s32 64, 64
          %202 = vsyncadd %s196, %s201
          %s203 = smul.addr %s26, 64
          %s204 = scalar_lea.hbm %s2, %s203
          %s206 = sshll.u32 %s199, 4
          %s207 = int_to_ptr.vmem [resolvable:$true] %s206
          %209 = dma.hbm_to_vmem [thread:$0]  %s204, 64, %s207, %s196
        $region28: #{tpu_custom_call.1} parent=15 // pred_fallthru
          _
      $region16: #{tpu_custom_call.1} parent=5 // pred_fallthru
        _
      %p210 = scmp.le.s32.totalorder 1, %s18
      %p211 = scmp.lt.s32.totalorder %s18, 7
      %p212 = pnand %p210, %p211
      %p213 = pneg %p212
      // Predicated region
      $region29: #{tpu_custom_call.1} parent=5 // pred_check
        _
      $region30: #{tpu_custom_call.1} parent=5 // pred_check_branch
        %215 = sbr.rel (%p212) target = $region32
      $region31: #{tpu_custom_call.1} parent=5 // pred_region
        %s216 = ssub.s32 %s18, 1
        %s217 = sand.u32 %s43, 1
        %s218 = scalar_lea.sflag [#allocation4], %s217
        %s219 = sand.u32 %s43, 1
        %s220 = smul.addr %s219, 8
        %s221 = scalar_lea.vmem [#allocation3], %s220
        // Predicated region
        $region33: #{tpu_custom_call.1} parent=31 // pred_check
          %p222 = pneg %p56
        $region34: #{tpu_custom_call.1} parent=31 // pred_check_branch
          %224 = sbr.rel (%p222) target = $region36
        $region35: #{tpu_custom_call.1} parent=31 // pred_region
          %225 = dma.done %s218, 128
        $region36: #{tpu_custom_call.1} parent=31 // pred_fallthru
          _
        %s226 = sand.u32 %s23, 1
        %s227 = scalar_lea.sflag [#allocation7], %s226
        %s228 = sand.u32 %s69, 1
        %s229 = smul.addr %s228, 32
        %s230 = scalar_lea.vmem [#allocation6], %s229
        // Predicated region
        $region37: #{tpu_custom_call.1} parent=31 // pred_check
          %p231 = pneg %p82
        $region38: #{tpu_custom_call.1} parent=31 // pred_check_branch
          %233 = sbr.rel (%p231) target = $region40
        $region39: #{tpu_custom_call.1} parent=31 // pred_region
          %234 = dma.done %s227, 512
        $region40: #{tpu_custom_call.1} parent=31 // pred_fallthru
          _
        %s235 = sand.u32 %s23, 1
        %s236 = scalar_lea.sflag [#allocation7], %s235
        %s237 = sand.u32 %s95, 1
        %s238 = smul.addr %s237, 4
        %s239 = scalar_lea.vmem [#allocation8], %s238
        // Predicated region
        $region41: #{tpu_custom_call.1} parent=31 // pred_check
          %p240 = pneg %p108
        $region42: #{tpu_custom_call.1} parent=31 // pred_check_branch
          %242 = sbr.rel (%p240) target = $region44
        $region43: #{tpu_custom_call.1} parent=31 // pred_region
          %243 = dma.done %s236, 64
        $region44: #{tpu_custom_call.1} parent=31 // pred_fallthru
          _
        %s244 = sand.u32 %s43, 1
        %s245 = scalar_lea.sflag [#allocation4], %s244
        %s246 = sand.u32 %s43, 1
        %s247 = smul.addr %s246, 8
        %s248 = scalar_lea.vmem [#allocation3], %s247
        %p249 = pneg %p56
        %p250 = pneg %p53
        %s251 = sand.u32 %s23, 1
        %s252 = scalar_lea.sflag [#allocation7], %s251
        %s253 = sand.u32 %s69, 1
        %s254 = smul.addr %s253, 32
        %s255 = scalar_lea.vmem [#allocation6], %s254
        %p256 = pneg %p82
        %p257 = pneg %p79
        %s258 = sand.u32 %s23, 1
        %s259 = scalar_lea.sflag [#allocation7], %s258
        %s260 = sand.u32 %s95, 1
        %s261 = smul.addr %s260, 4
        %s262 = scalar_lea.vmem [#allocation8], %s261
        %p263 = pneg %p108
        %p264 = pneg %p105
        %p265 = pneg %p134
        %p266 = pneg %p131
        %s267 = sand.u32 %s121, 1
        %s268 = scalar_lea.sflag [#allocation5], %s267
        %s269 = sand.u32 %s121, 1
        %s270 = smul.addr %s269, 8
        %s271 = scalar_lea.vmem [#allocation9], %s270
        %p272 = scmp.eq.s32.totalorder %s28, 0
        // Predicated region
        $region45: #{tpu_custom_call.1} parent=31 // pred_check
          %p273 = pneg %p272
        $region46: #{tpu_custom_call.1} parent=31 // pred_check_branch
          %275 = sbr.rel (%p273) target = $region48
        $region47: #{tpu_custom_call.1} parent=31 // pred_region
          %v276 = vld [vmem:[%s221] sm:$0xff]
          %vm277 = vcmask 261120
          %278 = vst.msk [vmem:[#allocation2] sm:$0xff] %vm277, %v276
        $region48: #{tpu_custom_call.1} parent=31 // pred_fallthru
          _
        %v279 = vld [vmem:[#allocation2] sm:$0xff]
        %v280 = vld [vmem:[%s230] sm:$0xff]
        %v281 = vld [vmem:[%s230 + $0x8] sm:$0xff]
        %v282 = vld [vmem:[%s230 + $0x10] sm:$0xff]
        %v283 = vld [vmem:[%s230 + $0x18] sm:$0xff]
        %v284 = vld [vmem:[%s239] sm:$0x7]
        %v285 = vlaneseq
        %v286 = vshrl.u32 %v285, 7
        %v287 = vsub.s32 0, %v286
        %v288 = vrot.slane %v284, %v287
        %vm289 = vcmask 261120
        %v291 = vsel %vm289, %v279, 0
        %293 = vmatprep.subr.mxu0 0.0
        %294 = vmatpush1.msra.mxu0 %v280
        %295 = vmatprep.subr.mxu0 0.0
        %296 = vmatpush1.msra.mxu0 %v281
        %297 = vmatprep.subr.mxu0 0.0
        %298 = vmatpush1.msra.mxu0 %v282
        %299 = vmatprep.subr.mxu0 0.0
        %300 = vmatpush1.msra.mxu0 %v283
        %301 = vmatprep.subr.mxu0 0.0
        %302 = vmatpush1.msra.mxu0 0.0
        %303 = vmatprep.subr.mxu0 0.0
        %304 = vmatpush1.msra.mxu0 0.0
        %305 = vmatprep.subr.mxu0 0.0
        %306 = vmatpush1.msra.mxu0 0.0
        %307 = vmatprep.subr.mxu0 0.0
        %308 = vmatpush1.msra.mxu0 0.0
        %309 = vmatprep.subr.mxu0 0.0
        %310 = vmatpush1.msra.mxu0 0.0
        %311 = vmatprep.subr.mxu0 0.0
        %312 = vmatpush1.msra.mxu0 0.0
        %313 = vmatprep.subr.mxu0 0.0
        %314 = vmatpush1.msra.mxu0 0.0
        %315 = vmatprep.subr.mxu0 0.0
        %316 = vmatpush1.msra.mxu0 0.0
        %317 = vmatprep.subr.mxu0 0.0
        %318 = vmatpush1.msra.mxu0 0.0
        %319 = vmatprep.subr.mxu0 0.0
        %320 = vmatpush1.msra.mxu0 0.0
        %321 = vmatprep.subr.mxu0 0.0
        %322 = vmatpush1.msra.mxu0 0.0
        %323 = vmatprep.subr.mxu0 0.0
        %324 = vmatpush1.msra.mxu0 0.0
        %325 = vmatprep.subr.mxu0 0.0
        %326 = vmatpush1.msra.mxu0 0.0
        %327 = vmatprep.subr.mxu0 0.0
        %328 = vmatpush1.msra.mxu0 0.0
        %329 = vmatprep.subr.mxu0 0.0
        %330 = vmatpush1.msra.mxu0 0.0
        %331 = vmatprep.subr.mxu0 0.0
        %332 = vmatpush1.msra.mxu0 0.0
        %333 = vmatprep.subr.mxu0 0.0
        %334 = vmatpush1.msra.mxu0 0.0
        %335 = vmatprep.subr.mxu0 0.0
        %336 = vmatpush1.msra.mxu0 0.0
        %337 = vmatprep.subr.mxu0 0.0
        %338 = vmatpush1.msra.mxu0 0.0
        %339 = vmatprep.subr.mxu0 0.0
        %340 = vmatpush1.msra.mxu0 0.0
        %341 = vmatprep.subr.mxu0 0.0
        %342 = vmatpush1.msra.mxu0 0.0
        %343 = vmatprep.subr.mxu0 0.0
        %344 = vmatpush1.msra.mxu0 0.0
        %345 = vmatprep.subr.mxu0 0.0
        %346 = vmatpush1.msra.mxu0 0.0
        %347 = vmatprep.subr.mxu0 0.0
        %348 = vmatpush1.msra.mxu0 0.0
        %349 = vmatprep.subr.mxu0 0.0
        %350 = vmatpush1.msra.mxu0 0.0
        %351 = vmatprep.subr.mxu0 0.0
        %352 = vmatpush1.msra.mxu0 0.0
        %353 = vmatprep.subr.mxu0 0.0
        %354 = vmatpush1.msra.mxu0 0.0
        %355 = vmatprep.subr.mxu0 0.0
        %356 = vmatpush1.msra.mxu0 0.0
        %357 = vmatprep.mubr.f32.mxu0 0.0
        %358 = vmatmul.mubr.f32.gmra.mrb[0].mxu0 %v291
        %v359 = vpop.f32.mrb[0].mxu0
        %v360 = vadd.f32 %v288, %v359
        %v361 = vpop.f32.mrb[0].mxu0
        %362 = vdwg.mxu0
        %v363 = vsel %vm289, %v360, 0.0
        %364 = vadd.xlane.f32.xlu0 %v363
        %v365 = vpop.xlane.xlu0 %364
        %v366 = vrcp.pop 32.0
        %v367 = vmul.f32 %v365, %v366
        %v368 = vsub.f32 %v360, %v367
        %v369 = vmul.f32 %v368, %v368
        %v370 = vsel %vm289, %v369, 0.0
        %371 = vadd.xlane.f32.xlu0 %v370
        %v372 = vpop.xlane.xlu0 %371
        %v373 = vmul.f32 %v372, %v366
        %v374 = vadd.f32 %v373, 1e-05
        %v375 = vrsqrt.pop %v374
        %v376 = vmul.f32 %v368, %v375
        %v377 = vlaneseq
        %v378 = vshrl.u32 %v377, 7
        %v379 = vsub.s32 1, %v378
        %v380 = vrot.slane %v284, %v379
        %v381 = vmul.f32 %v376, %v380
        %v382 = vlaneseq
        %v383 = vshrl.u32 %v382, 7
        %v384 = vsub.s32 2, %v383
        %v385 = vrot.slane %v284, %v384
        %v386 = vadd.f32 %v381, %v385
        %387 = vst.msk [vmem:[#allocation2] sm:$0xff] %vm289, %v386
        %p388 = scmp.eq.s32.totalorder %s28, 2
        // Predicated region
        $region49: #{tpu_custom_call.1} parent=31 // pred_check
          %p389 = pneg %p388
        $region50: #{tpu_custom_call.1} parent=31 // pred_check_branch
          %391 = sbr.rel (%p389) target = $region52
        $region51: #{tpu_custom_call.1} parent=31 // pred_region
          %392 = vst.msk [vmem:[%s271] sm:$0xff] %vm289, %v386
        $region52: #{tpu_custom_call.1} parent=31 // pred_fallthru
          _
        %s393 = sand.u32 %s121, 1
        %s394 = scalar_lea.sflag [#allocation5], %s393
        %s395 = sand.u32 %s121, 1
        %s396 = smul.addr %s395, 8
        %s397 = scalar_lea.vmem [#allocation9], %s396
        // Predicated region
        $region53: #{tpu_custom_call.1} parent=31 // pred_check
          %p398 = pneg %p131
        $region54: #{tpu_custom_call.1} parent=31 // pred_check_branch
          %400 = sbr.rel (%p398) target = $region56
        $region55: #{tpu_custom_call.1} parent=31 // pred_region
          %s402 = ssub.s32 128, 128
          %403 = vsyncadd %s394, %s402
          %s404 = smul.addr %s27, 128
          %s405 = scalar_lea.hbm %s3, %s404
          %s407 = sshll.u32 %s397, 4
          %s408 = int_to_ptr.vmem [resolvable:$true] %s407
          %410 = dma.vmem_to_hbm [thread:$0]  %s408, 128, %s405, %s394
        $region56: #{tpu_custom_call.1} parent=31 // pred_fallthru
          _
      $region32: #{tpu_custom_call.1} parent=5 // pred_fallthru
        _
      %p411 = scmp.le.s32.totalorder 2, %s18
      // Predicated region
      $region57: #{tpu_custom_call.1} parent=5 // pred_check
        %p412 = pneg %p411
      $region58: #{tpu_custom_call.1} parent=5 // pred_check_branch
        %414 = sbr.rel (%p412) target = $region60
      $region59: #{tpu_custom_call.1} parent=5 // pred_region
        %s415 = ssub.s32 %s18, 2
        // Predicated region
        $region61: #{tpu_custom_call.1} parent=59 // pred_check
          %p416 = pneg %p137
        $region62: #{tpu_custom_call.1} parent=59 // pred_check_branch
          %418 = sbr.rel (%p416) target = $region64
        $region63: #{tpu_custom_call.1} parent=59 // pred_region
          %s419 = sand.u32 %s122, 1
          %s420 = scalar_lea.sflag [#allocation5], %s419
          %s421 = sand.u32 %s122, 1
          %s422 = smul.addr %s421, 8
          %s423 = scalar_lea.vmem [#allocation9], %s422
          %424 = dma.done %s420, 128
        $region64: #{tpu_custom_call.1} parent=59 // pred_fallthru
          _
      $region60: #{tpu_custom_call.1} parent=5 // pred_fallthru
        _
    $region6: #{tpu_custom_call.1} parent=1 // loop_footer
      %s22 = sadd.s32 1, %s18
    $region7: #{tpu_custom_call.1} parent=1 // loop_footer_branch
      %17 = sbr.rel target = $region3
    $region8: #{tpu_custom_call.1} parent=1 // loop_exit
      _
    %425 = vsyncpa [#allocation4], 1
    %s426 = scalar_lea.sflag [#allocation4], 1
    %427 = vsyncpa %s426, 1
    %428 = vsyncpa [#allocation7], 1
    %s429 = scalar_lea.sflag [#allocation7], 1
    %430 = vsyncpa %s429, 1
    %431 = vsyncpa [#allocation5], 1
    %s432 = scalar_lea.sflag [#allocation5], 1
    %433 = vsyncpa %s432, 1

</llo_original>
